<compile_context>
chip_gen: v7x
topology: tpu7x:2x2x1
jax: 0.10.0
libtpu: 0.0.40
codegen_flags: <defaults>
</compile_context>

<pallas_src>
import jax
import jax.numpy as jnp
from jax import lax
from jax.experimental import pallas as pl
from jax.experimental.pallas import tpu as pltpu

LANE = 128           # vreg lane width; last dim of every block
LANE_SHIFT = 7       # log2(LANE)
TILE_ROWS = 1024     # 1024 x 128 f32 block = 512 KiB -> a few MiB pipelined


def _u32_as_i32(v):
    """A uint32 literal reinterpreted as an int32 constant (two's complement)."""
    v &= 0xFFFFFFFF
    return jnp.int32(v - (1 << 32) if v >= (1 << 31) else v)


def _rotl32(v, r):
    """32-bit rotate-left on int32 values (bit semantics identical to uint32)."""
    return (v << r) | lax.shift_right_logical(v, jnp.int32(32 - r))


def _threefry2x32(k0, k1, x0, x1):
    """Threefry-2x32, 20 rounds (same schedule as jax.random's threefry).

    All values are int32; add/xor/shift have the same bit-level behaviour as
    uint32, so no unsigned types are needed in the kernel.
    """
    ks2 = k0 ^ k1 ^ _u32_as_i32(0x1BD11BDA)
    ks = (k1, ks2, k0)
    x0 = x0 + k0
    x1 = x1 + k1
    rotations = ((13, 15, 26, 6), (17, 29, 16, 24))
    for i in range(5):
        for r in rotations[i % 2]:
            x0 = x0 + x1
            x1 = _rotl32(x1, r)
            x1 = x1 ^ x0
        x0 = x0 + ks[i % 3]
        x1 = x1 + ks[(i + 1) % 3] + (i + 1)
    return x0, x1


def _erfinv_f32(x, one_minus_x2):
    """Giles' single-precision rational approximation of erfinv(x).

    `one_minus_x2` is 1 - x**2 supplied by the caller in a cancellation-free
    form.  Uses only log, sqrt, FMA and select (all EUP/VPU-friendly).
    """
    w = -jnp.log(one_minus_x2)
    # central branch (|z| <~ 2.9)
    wc = w - 2.5
    p = 2.81022636e-08
    for c in (3.43273939e-07, -3.5233877e-06, -4.39150654e-06, 0.00021858087,
              -0.00125372503, -0.00417768164, 0.246640727, 1.50140941):
        p = p * wc + c
    # tail branch
    wt = jnp.sqrt(w) - 3.0
    q = -0.000200214257
    for c in (0.000100950558, 0.00134934322, -0.00367342844, 0.00573950773,
              -0.0076224613, 0.00943887047, 1.00167406, 2.83297682):
        q = q * wt + c
    return jnp.where(w < 5.0, p, q) * x


def _make_noise_kernel(noise_scale, noise_shift, x_min, x_max, tile_rows):
    noise_scale = float(noise_scale)   # eps * std  (folded constants)
    noise_shift = float(noise_shift)   # eps * mean
    x_min = float(x_min)
    x_max = float(x_max)

    def kernel(seed_ref, x_ref, o_ref):
        shape = x_ref.shape                          # (tile_rows, LANE)
        # Globally-unique per-element counters -> independent noise per tile.
        base = pl.program_id(0) * (tile_rows * LANE)
        row = lax.broadcasted_iota(jnp.int32, shape, 0)
        col = lax.broadcasted_iota(jnp.int32, shape, 1)
        ctr0 = base + (row << LANE_SHIFT) + col
        ctr1 = _u32_as_i32(0x2545F491)
        k0 = seed_ref[0]
        k1 = _u32_as_i32(0x9E3779B9)

        bits, _ = _threefry2x32(k0, k1, ctr0, ctr1)

        # Top 23 bits -> uniform strictly inside (0, 1) (exact in f32).
        m = lax.shift_right_logical(bits, jnp.int32(9)).astype(jnp.float32)
        u = (m + 0.5) * (1.0 / 8388608.0)
        xe = 2.0 * u - 1.0                           # exact (Sterbenz)
        one_minus_x2 = 4.0 * u * (1.0 - u)           # == 1 - xe**2, no cancellation
        z = 1.4142135623730951 * _erfinv_f32(xe, one_minus_x2)   # N(0, 1)

        x = x_ref[...].astype(jnp.float32)           # all math in f32 (v5e-safe)
        y = x + (z * noise_scale + noise_shift)
        o_ref[...] = jnp.clip(y, x_min, x_max).astype(o_ref.dtype)

    return kernel


def add_gaussian_noise(x, seed, *, mean=0.0, std=1.0, eps=0.025,
                       x_min=0.0, x_max=1.0):
    """Pallas TPU equivalent of AddGaussianNoise.forward (noise drawn in-kernel)."""
    x = jnp.asarray(x)
    orig_shape = x.shape
    if jnp.issubdtype(x.dtype, jnp.floating):
        out_dtype = x.dtype
    else:
        # Integer inputs promote to f32 (same as torch's int + float eps*noise).
        x = x.astype(jnp.float32)
        out_dtype = jnp.float32

    n = x.size
    xf = x.reshape(-1)                      # free for a contiguous array
    pad = (-n) % LANE
    if pad:
        # TODO(synk): ragged tail (n % 128 != 0) falls back to a pad+slice copy;
        # a masked tail store in the last tile would avoid the extra HBM pass.
        xf = jnp.concatenate([xf, jnp.zeros((pad,), xf.dtype)])
    rows = (n + pad) // LANE
    x2 = xf.reshape(rows, LANE)             # lane-dense (rows, 128) slab

    tile_rows = rows if rows <= TILE_ROWS else TILE_ROWS
    grid = (pl.cdiv(rows, tile_rows),)      # partial trailing tile is masked

    seed_arr = jnp.asarray([seed], dtype=jnp.int32)
    kernel = _make_noise_kernel(eps * std, eps * mean, x_min, x_max, tile_rows)

    bytes_per_elem = jnp.dtype(x.dtype).itemsize + jnp.dtype(out_dtype).itemsize
    cost = pl.CostEstimate(flops=150 * n, transcendentals=2 * n,
                           bytes_accessed=bytes_per_elem * n)

    out2 = pl.pallas_call(
        kernel,
        out_shape=jax.ShapeDtypeStruct((rows, LANE), out_dtype),
        grid_spec=pltpu.PrefetchScalarGridSpec(
            num_scalar_prefetch=1,                                  # seed -> SMEM
            grid=grid,
            in_specs=[pl.BlockSpec((tile_rows, LANE), lambda i, seed: (i, 0))],
            out_specs=pl.BlockSpec((tile_rows, LANE), lambda i, seed: (i, 0)),
        ),
        compiler_params=pltpu.CompilerParams(
            dimension_semantics=("parallel",),    # shard tiles across TCs (v7x)
            vmem_limit_bytes=32 * 1024 * 1024,
        ),
        cost_estimate=cost,
    )(seed_arr, x2)

    out = out2.reshape(-1)
    if pad:
        out = out[:n]
    return out.reshape(orig_shape)


if __name__ == "__main__":
    key = jax.random.PRNGKey(0)
    # NCHW image-like batch, values in [0.2, 0.8] so eps=0.025 noise never clips.
    x = 0.2 + 0.6 * jax.random.uniform(key, (2, 4, 16, 16), dtype=jnp.float32)

    y = jax.block_until_ready(add_gaussian_noise(x, seed=0, mean=0.0, std=1.0,
                                                 eps=0.025, x_min=0.0, x_max=1.0))

    # Shape / dtype preserved, output clipped to [0, 1], everything finite.
    assert y.shape == x.shape and y.dtype == x.dtype
    assert bool(jnp.all(jnp.isfinite(y)))
    assert float(jnp.min(y)) >= 0.0 and float(jnp.max(y)) <= 1.0

    # Noise statistics: (y - x) / eps should look like a standard normal.
    z = (y - x) / 0.025
    assert 0.8 < float(jnp.std(z)) < 1.2
    assert abs(float(jnp.mean(z))) < 0.2
    frac_1sigma = float(jnp.mean((jnp.abs(z) < 1.0).astype(jnp.float32)))
    assert 0.58 < frac_1sigma < 0.78

    # Deterministic for a fixed seed; different seeds give different noise.
    y_same = jax.block_until_ready(add_gaussian_noise(x, seed=0))
    y_diff = jax.block_until_ready(add_gaussian_noise(x, seed=1))
    assert bool(jnp.all(y == y_same))
    assert not bool(jnp.all(y == y_diff))

    # Multi-tile path: grid > 1 with a partial trailing tile, bf16 in/out.
    xb = jax.random.uniform(jax.random.PRNGKey(1), (4, 8, 100, 128),
                            dtype=jnp.bfloat16)
    yb = jax.block_until_ready(add_gaussian_noise(xb, seed=7))
    assert yb.shape == xb.shape and yb.dtype == xb.dtype
    ybf = yb.astype(jnp.float32)
    assert float(jnp.min(ybf)) >= 0.0 and float(jnp.max(ybf)) <= 1.0

    print("KERNEL_OK")
</pallas_src>

<mosaic_0001>
module attributes {stable_mosaic.version = 11 : i64} {
  func.func @kernel(%arg0: i32, %arg1: memref<1xi32, #tpu.memory_space<smem>>, %arg2: memref<16x128xf32, #tpu.memory_space<vmem>>, %arg3: memref<16x128xf32, #tpu.memory_space<vmem>>) attributes {dimension_semantics = [#tpu.dimension_semantics<parallel>], iteration_bounds = array<i64: 1>, scalar_prefetch = 1 : i64, scratch_operands = 0 : i64, tpu.core_type = #tpu.core_type<tc>, window_params = [{transform_indices = @transform_0, window_bounds = array<i64: 16, 128>}, {transform_indices = @transform_1, window_bounds = array<i64: 16, 128>}]} {
    %c2048_i32 = arith.constant 2048 : i32
    %0 = arith.muli %arg0, %c2048_i32 : i32
    %1 = tpu.iota {dimensions = array<i32: 0>} : vector<16x128xi32>
    %2 = tpu.iota {dimensions = array<i32: 1>} : vector<16x128xi32>
    %c7_i32 = arith.constant 7 : i32
    %3 = vector.broadcast %c7_i32 : i32 to vector<16x128xi32>
    %4 = arith.shli %1, %3 : vector<16x128xi32>
    %5 = vector.broadcast %0 : i32 to vector<16x128xi32>
    %6 = arith.addi %5, %4 : vector<16x128xi32>
    %7 = arith.addi %6, %2 : vector<16x128xi32>
    %c0 = arith.constant 0 : index
    %8 = memref.load %arg1[%c0] : memref<1xi32, #tpu.memory_space<smem>>
    %c-1640531527_i32 = arith.constant -1640531527 : i32
    %9 = arith.xori %8, %c-1640531527_i32 : i32
    %c466688986_i32 = arith.constant 466688986 : i32
    %10 = arith.xori %9, %c466688986_i32 : i32
    %11 = vector.broadcast %8 : i32 to vector<16x128xi32>
    %12 = arith.addi %7, %11 : vector<16x128xi32>
    %c625341585_i32 = arith.constant 625341585 : i32
    %c-1640531527_i32_0 = arith.constant -1640531527 : i32
    %13 = arith.addi %c625341585_i32, %c-1640531527_i32_0 : i32
    %14 = vector.broadcast %13 : i32 to vector<16x128xi32>
    %15 = arith.addi %12, %14 : vector<16x128xi32>
    %c13_i32 = arith.constant 13 : i32
    %16 = arith.shli %13, %c13_i32 : i32
    %c19_i32 = arith.constant 19 : i32
    %17 = arith.shrui %13, %c19_i32 : i32
    %18 = arith.ori %16, %17 : i32
    %19 = vector.broadcast %18 : i32 to vector<16x128xi32>
    %20 = arith.xori %19, %15 : vector<16x128xi32>
    %21 = arith.addi %15, %20 : vector<16x128xi32>
    %c15_i32 = arith.constant 15 : i32
    %22 = vector.broadcast %c15_i32 : i32 to vector<16x128xi32>
    %23 = arith.shli %20, %22 : vector<16x128xi32>
    %c17_i32 = arith.constant 17 : i32
    %24 = vector.broadcast %c17_i32 : i32 to vector<16x128xi32>
    %25 = arith.shrui %20, %24 : vector<16x128xi32>
    %26 = arith.ori %23, %25 : vector<16x128xi32>
    %27 = arith.xori %26, %21 : vector<16x128xi32>
    %28 = arith.addi %21, %27 : vector<16x128xi32>
    %c26_i32 = arith.constant 26 : i32
    %29 = vector.broadcast %c26_i32 : i32 to vector<16x128xi32>
    %30 = arith.shli %27, %29 : vector<16x128xi32>
    %c6_i32 = arith.constant 6 : i32
    %31 = vector.broadcast %c6_i32 : i32 to vector<16x128xi32>
    %32 = arith.shrui %27, %31 : vector<16x128xi32>
    %33 = arith.ori %30, %32 : vector<16x128xi32>
    %34 = arith.xori %33, %28 : vector<16x128xi32>
    %35 = arith.addi %28, %34 : vector<16x128xi32>
    %c6_i32_1 = arith.constant 6 : i32
    %36 = vector.broadcast %c6_i32_1 : i32 to vector<16x128xi32>
    %37 = arith.shli %34, %36 : vector<16x128xi32>
    %c26_i32_2 = arith.constant 26 : i32
    %38 = vector.broadcast %c26_i32_2 : i32 to vector<16x128xi32>
    %39 = arith.shrui %34, %38 : vector<16x128xi32>
    %40 = arith.ori %37, %39 : vector<16x128xi32>
    %41 = arith.xori %40, %35 : vector<16x128xi32>
    %c-1640531527_i32_3 = arith.constant -1640531527 : i32
    %42 = vector.broadcast %c-1640531527_i32_3 : i32 to vector<16x128xi32>
    %43 = arith.addi %35, %42 : vector<16x128xi32>
    %44 = vector.broadcast %10 : i32 to vector<16x128xi32>
    %45 = arith.addi %41, %44 : vector<16x128xi32>
    %c1_i32 = arith.constant 1 : i32
    %46 = vector.broadcast %c1_i32 : i32 to vector<16x128xi32>
    %47 = arith.addi %45, %46 : vector<16x128xi32>
    %48 = arith.addi %43, %47 : vector<16x128xi32>
    %c17_i32_4 = arith.constant 17 : i32
    %49 = vector.broadcast %c17_i32_4 : i32 to vector<16x128xi32>
    %50 = arith.shli %47, %49 : vector<16x128xi32>
    %c15_i32_5 = arith.constant 15 : i32
    %51 = vector.broadcast %c15_i32_5 : i32 to vector<16x128xi32>
    %52 = arith.shrui %47, %51 : vector<16x128xi32>
    %53 = arith.ori %50, %52 : vector<16x128xi32>
    %54 = arith.xori %53, %48 : vector<16x128xi32>
    %55 = arith.addi %48, %54 : vector<16x128xi32>
    %c29_i32 = arith.constant 29 : i32
    %56 = vector.broadcast %c29_i32 : i32 to vector<16x128xi32>
    %57 = arith.shli %54, %56 : vector<16x128xi32>
    %c3_i32 = arith.constant 3 : i32
    %58 = vector.broadcast %c3_i32 : i32 to vector<16x128xi32>
    %59 = arith.shrui %54, %58 : vector<16x128xi32>
    %60 = arith.ori %57, %59 : vector<16x128xi32>
    %61 = arith.xori %60, %55 : vector<16x128xi32>
    %62 = arith.addi %55, %61 : vector<16x128xi32>
    %c16_i32 = arith.constant 16 : i32
    %63 = vector.broadcast %c16_i32 : i32 to vector<16x128xi32>
    %64 = arith.shli %61, %63 : vector<16x128xi32>
    %c16_i32_6 = arith.constant 16 : i32
    %65 = vector.broadcast %c16_i32_6 : i32 to vector<16x128xi32>
    %66 = arith.shrui %61, %65 : vector<16x128xi32>
    %67 = arith.ori %64, %66 : vector<16x128xi32>
    %68 = arith.xori %67, %62 : vector<16x128xi32>
    %69 = arith.addi %62, %68 : vector<16x128xi32>
    %c24_i32 = arith.constant 24 : i32
    %70 = vector.broadcast %c24_i32 : i32 to vector<16x128xi32>
    %71 = arith.shli %68, %70 : vector<16x128xi32>
    %c8_i32 = arith.constant 8 : i32
    %72 = vector.broadcast %c8_i32 : i32 to vector<16x128xi32>
    %73 = arith.shrui %68, %72 : vector<16x128xi32>
    %74 = arith.ori %71, %73 : vector<16x128xi32>
    %75 = arith.xori %74, %69 : vector<16x128xi32>
    %76 = vector.broadcast %10 : i32 to vector<16x128xi32>
    %77 = arith.addi %69, %76 : vector<16x128xi32>
    %78 = vector.broadcast %8 : i32 to vector<16x128xi32>
    %79 = arith.addi %75, %78 : vector<16x128xi32>
    %c2_i32 = arith.constant 2 : i32
    %80 = vector.broadcast %c2_i32 : i32 to vector<16x128xi32>
    %81 = arith.addi %79, %80 : vector<16x128xi32>
    %82 = arith.addi %77, %81 : vector<16x128xi32>
    %c13_i32_7 = arith.constant 13 : i32
    %83 = vector.broadcast %c13_i32_7 : i32 to vector<16x128xi32>
    %84 = arith.shli %81, %83 : vector<16x128xi32>
    %c19_i32_8 = arith.constant 19 : i32
    %85 = vector.broadcast %c19_i32_8 : i32 to vector<16x128xi32>
    %86 = arith.shrui %81, %85 : vector<16x128xi32>
    %87 = arith.ori %84, %86 : vector<16x128xi32>
    %88 = arith.xori %87, %82 : vector<16x128xi32>
    %89 = arith.addi %82, %88 : vector<16x128xi32>
    %c15_i32_9 = arith.constant 15 : i32
    %90 = vector.broadcast %c15_i32_9 : i32 to vector<16x128xi32>
    %91 = arith.shli %88, %90 : vector<16x128xi32>
    %c17_i32_10 = arith.constant 17 : i32
    %92 = vector.broadcast %c17_i32_10 : i32 to vector<16x128xi32>
    %93 = arith.shrui %88, %92 : vector<16x128xi32>
    %94 = arith.ori %91, %93 : vector<16x128xi32>
    %95 = arith.xori %94, %89 : vector<16x128xi32>
    %96 = arith.addi %89, %95 : vector<16x128xi32>
    %c26_i32_11 = arith.constant 26 : i32
    %97 = vector.broadcast %c26_i32_11 : i32 to vector<16x128xi32>
    %98 = arith.shli %95, %97 : vector<16x128xi32>
    %c6_i32_12 = arith.constant 6 : i32
    %99 = vector.broadcast %c6_i32_12 : i32 to vector<16x128xi32>
    %100 = arith.shrui %95, %99 : vector<16x128xi32>
    %101 = arith.ori %98, %100 : vector<16x128xi32>
    %102 = arith.xori %101, %96 : vector<16x128xi32>
    %103 = arith.addi %96, %102 : vector<16x128xi32>
    %c6_i32_13 = arith.constant 6 : i32
    %104 = vector.broadcast %c6_i32_13 : i32 to vector<16x128xi32>
    %105 = arith.shli %102, %104 : vector<16x128xi32>
    %c26_i32_14 = arith.constant 26 : i32
    %106 = vector.broadcast %c26_i32_14 : i32 to vector<16x128xi32>
    %107 = arith.shrui %102, %106 : vector<16x128xi32>
    %108 = arith.ori %105, %107 : vector<16x128xi32>
    %109 = arith.xori %108, %103 : vector<16x128xi32>
    %110 = vector.broadcast %8 : i32 to vector<16x128xi32>
    %111 = arith.addi %103, %110 : vector<16x128xi32>
    %c-1640531527_i32_15 = arith.constant -1640531527 : i32
    %112 = vector.broadcast %c-1640531527_i32_15 : i32 to vector<16x128xi32>
    %113 = arith.addi %109, %112 : vector<16x128xi32>
    %c3_i32_16 = arith.constant 3 : i32
    %114 = vector.broadcast %c3_i32_16 : i32 to vector<16x128xi32>
    %115 = arith.addi %113, %114 : vector<16x128xi32>
    %116 = arith.addi %111, %115 : vector<16x128xi32>
    %c17_i32_17 = arith.constant 17 : i32
    %117 = vector.broadcast %c17_i32_17 : i32 to vector<16x128xi32>
    %118 = arith.shli %115, %117 : vector<16x128xi32>
    %c15_i32_18 = arith.constant 15 : i32
    %119 = vector.broadcast %c15_i32_18 : i32 to vector<16x128xi32>
    %120 = arith.shrui %115, %119 : vector<16x128xi32>
    %121 = arith.ori %118, %120 : vector<16x128xi32>
    %122 = arith.xori %121, %116 : vector<16x128xi32>
    %123 = arith.addi %116, %122 : vector<16x128xi32>
    %c29_i32_19 = arith.constant 29 : i32
    %124 = vector.broadcast %c29_i32_19 : i32 to vector<16x128xi32>
    %125 = arith.shli %122, %124 : vector<16x128xi32>
    %c3_i32_20 = arith.constant 3 : i32
    %126 = vector.broadcast %c3_i32_20 : i32 to vector<16x128xi32>
    %127 = arith.shrui %122, %126 : vector<16x128xi32>
    %128 = arith.ori %125, %127 : vector<16x128xi32>
    %129 = arith.xori %128, %123 : vector<16x128xi32>
    %130 = arith.addi %123, %129 : vector<16x128xi32>
    %c16_i32_21 = arith.constant 16 : i32
    %131 = vector.broadcast %c16_i32_21 : i32 to vector<16x128xi32>
    %132 = arith.shli %129, %131 : vector<16x128xi32>
    %c16_i32_22 = arith.constant 16 : i32
    %133 = vector.broadcast %c16_i32_22 : i32 to vector<16x128xi32>
    %134 = arith.shrui %129, %133 : vector<16x128xi32>
    %135 = arith.ori %132, %134 : vector<16x128xi32>
    %136 = arith.xori %135, %130 : vector<16x128xi32>
    %137 = arith.addi %130, %136 : vector<16x128xi32>
    %c24_i32_23 = arith.constant 24 : i32
    %138 = vector.broadcast %c24_i32_23 : i32 to vector<16x128xi32>
    %139 = arith.shli %136, %138 : vector<16x128xi32>
    %c8_i32_24 = arith.constant 8 : i32
    %140 = vector.broadcast %c8_i32_24 : i32 to vector<16x128xi32>
    %141 = arith.shrui %136, %140 : vector<16x128xi32>
    %142 = arith.ori %139, %141 : vector<16x128xi32>
    %143 = arith.xori %142, %137 : vector<16x128xi32>
    %c-1640531527_i32_25 = arith.constant -1640531527 : i32
    %144 = vector.broadcast %c-1640531527_i32_25 : i32 to vector<16x128xi32>
    %145 = arith.addi %137, %144 : vector<16x128xi32>
    %146 = vector.broadcast %10 : i32 to vector<16x128xi32>
    %147 = arith.addi %143, %146 : vector<16x128xi32>
    %c4_i32 = arith.constant 4 : i32
    %148 = vector.broadcast %c4_i32 : i32 to vector<16x128xi32>
    %149 = arith.addi %147, %148 : vector<16x128xi32>
    %150 = arith.addi %145, %149 : vector<16x128xi32>
    %c13_i32_26 = arith.constant 13 : i32
    %151 = vector.broadcast %c13_i32_26 : i32 to vector<16x128xi32>
    %152 = arith.shli %149, %151 : vector<16x128xi32>
    %c19_i32_27 = arith.constant 19 : i32
    %153 = vector.broadcast %c19_i32_27 : i32 to vector<16x128xi32>
    %154 = arith.shrui %149, %153 : vector<16x128xi32>
    %155 = arith.ori %152, %154 : vector<16x128xi32>
    %156 = arith.xori %155, %150 : vector<16x128xi32>
    %157 = arith.addi %150, %156 : vector<16x128xi32>
    %c15_i32_28 = arith.constant 15 : i32
    %158 = vector.broadcast %c15_i32_28 : i32 to vector<16x128xi32>
    %159 = arith.shli %156, %158 : vector<16x128xi32>
    %c17_i32_29 = arith.constant 17 : i32
    %160 = vector.broadcast %c17_i32_29 : i32 to vector<16x128xi32>
    %161 = arith.shrui %156, %160 : vector<16x128xi32>
    %162 = arith.ori %159, %161 : vector<16x128xi32>
    %163 = arith.xori %162, %157 : vector<16x128xi32>
    %164 = arith.addi %157, %163 : vector<16x128xi32>
    %c26_i32_30 = arith.constant 26 : i32
    %165 = vector.broadcast %c26_i32_30 : i32 to vector<16x128xi32>
    %166 = arith.shli %163, %165 : vector<16x128xi32>
    %c6_i32_31 = arith.constant 6 : i32
    %167 = vector.broadcast %c6_i32_31 : i32 to vector<16x128xi32>
    %168 = arith.shrui %163, %167 : vector<16x128xi32>
    %169 = arith.ori %166, %168 : vector<16x128xi32>
    %170 = arith.xori %169, %164 : vector<16x128xi32>
    %171 = arith.addi %164, %170 : vector<16x128xi32>
    %172 = vector.broadcast %10 : i32 to vector<16x128xi32>
    %173 = arith.addi %171, %172 : vector<16x128xi32>
    %c9_i32 = arith.constant 9 : i32
    %174 = vector.broadcast %c9_i32 : i32 to vector<16x128xi32>
    %175 = arith.shrui %173, %174 : vector<16x128xi32>
    %176 = arith.sitofp %175 : vector<16x128xi32> to vector<16x128xf32>
    %cst = arith.constant 5.000000e-01 : f32
    %177 = vector.broadcast %cst : f32 to vector<16x128xf32>
    %178 = arith.addf %176, %177 : vector<16x128xf32>
    %cst_32 = arith.constant 1.1920929E-7 : f32
    %179 = vector.broadcast %cst_32 : f32 to vector<16x128xf32>
    %180 = arith.mulf %178, %179 : vector<16x128xf32>
    %cst_33 = arith.constant 2.000000e+00 : f32
    %181 = vector.broadcast %cst_33 : f32 to vector<16x128xf32>
    %182 = arith.mulf %181, %180 : vector<16x128xf32>
    %cst_34 = arith.constant 1.000000e+00 : f32
    %183 = vector.broadcast %cst_34 : f32 to vector<16x128xf32>
    %184 = arith.subf %182, %183 : vector<16x128xf32>
    %cst_35 = arith.constant 4.000000e+00 : f32
    %185 = vector.broadcast %cst_35 : f32 to vector<16x128xf32>
    %186 = arith.mulf %185, %180 : vector<16x128xf32>
    %cst_36 = arith.constant 1.000000e+00 : f32
    %187 = vector.broadcast %cst_36 : f32 to vector<16x128xf32>
    %188 = arith.subf %187, %180 : vector<16x128xf32>
    %189 = arith.mulf %186, %188 : vector<16x128xf32>
    %190 = math.log %189 : vector<16x128xf32>
    %cst_37 = arith.constant 0.000000e+00 : f32
    %191 = vector.broadcast %cst_37 : f32 to vector<16x128xf32>
    %192 = arith.subf %191, %190 : vector<16x128xf32>
    %cst_38 = arith.constant 2.500000e+00 : f32
    %193 = vector.broadcast %cst_38 : f32 to vector<16x128xf32>
    %194 = arith.subf %192, %193 : vector<16x128xf32>
    %cst_39 = arith.constant 2.81022636E-8 : f32
    %195 = vector.broadcast %cst_39 : f32 to vector<16x128xf32>
    %196 = arith.mulf %195, %194 : vector<16x128xf32>
    %cst_40 = arith.constant 3.43273939E-7 : f32
    %197 = vector.broadcast %cst_40 : f32 to vector<16x128xf32>
    %198 = arith.addf %196, %197 : vector<16x128xf32>
    %199 = arith.mulf %198, %194 : vector<16x128xf32>
    %cst_41 = arith.constant -3.5233877E-6 : f32
    %200 = vector.broadcast %cst_41 : f32 to vector<16x128xf32>
    %201 = arith.addf %199, %200 : vector<16x128xf32>
    %202 = arith.mulf %201, %194 : vector<16x128xf32>
    %cst_42 = arith.constant -4.39150654E-6 : f32
    %203 = vector.broadcast %cst_42 : f32 to vector<16x128xf32>
    %204 = arith.addf %202, %203 : vector<16x128xf32>
    %205 = arith.mulf %204, %194 : vector<16x128xf32>
    %cst_43 = arith.constant 2.1858087E-4 : f32
    %206 = vector.broadcast %cst_43 : f32 to vector<16x128xf32>
    %207 = arith.addf %205, %206 : vector<16x128xf32>
    %208 = arith.mulf %207, %194 : vector<16x128xf32>
    %cst_44 = arith.constant -0.00125372503 : f32
    %209 = vector.broadcast %cst_44 : f32 to vector<16x128xf32>
    %210 = arith.addf %208, %209 : vector<16x128xf32>
    %211 = arith.mulf %210, %194 : vector<16x128xf32>
    %cst_45 = arith.constant -0.00417768164 : f32
    %212 = vector.broadcast %cst_45 : f32 to vector<16x128xf32>
    %213 = arith.addf %211, %212 : vector<16x128xf32>
    %214 = arith.mulf %213, %194 : vector<16x128xf32>
    %cst_46 = arith.constant 0.246640727 : f32
    %215 = vector.broadcast %cst_46 : f32 to vector<16x128xf32>
    %216 = arith.addf %214, %215 : vector<16x128xf32>
    %217 = arith.mulf %216, %194 : vector<16x128xf32>
    %cst_47 = arith.constant 1.50140941 : f32
    %218 = vector.broadcast %cst_47 : f32 to vector<16x128xf32>
    %219 = arith.addf %217, %218 : vector<16x128xf32>
    %220 = math.sqrt %192 : vector<16x128xf32>
    %cst_48 = arith.constant 3.000000e+00 : f32
    %221 = vector.broadcast %cst_48 : f32 to vector<16x128xf32>
    %222 = arith.subf %220, %221 : vector<16x128xf32>
    %cst_49 = arith.constant -2.00214257E-4 : f32
    %223 = vector.broadcast %cst_49 : f32 to vector<16x128xf32>
    %224 = arith.mulf %223, %222 : vector<16x128xf32>
    %cst_50 = arith.constant 1.00950558E-4 : f32
    %225 = vector.broadcast %cst_50 : f32 to vector<16x128xf32>
    %226 = arith.addf %224, %225 : vector<16x128xf32>
    %227 = arith.mulf %226, %222 : vector<16x128xf32>
    %cst_51 = arith.constant 0.00134934322 : f32
    %228 = vector.broadcast %cst_51 : f32 to vector<16x128xf32>
    %229 = arith.addf %227, %228 : vector<16x128xf32>
    %230 = arith.mulf %229, %222 : vector<16x128xf32>
    %cst_52 = arith.constant -0.00367342844 : f32
    %231 = vector.broadcast %cst_52 : f32 to vector<16x128xf32>
    %232 = arith.addf %230, %231 : vector<16x128xf32>
    %233 = arith.mulf %232, %222 : vector<16x128xf32>
    %cst_53 = arith.constant 0.00573950773 : f32
    %234 = vector.broadcast %cst_53 : f32 to vector<16x128xf32>
    %235 = arith.addf %233, %234 : vector<16x128xf32>
    %236 = arith.mulf %235, %222 : vector<16x128xf32>
    %cst_54 = arith.constant -0.0076224613 : f32
    %237 = vector.broadcast %cst_54 : f32 to vector<16x128xf32>
    %238 = arith.addf %236, %237 : vector<16x128xf32>
    %239 = arith.mulf %238, %222 : vector<16x128xf32>
    %cst_55 = arith.constant 0.00943887047 : f32
    %240 = vector.broadcast %cst_55 : f32 to vector<16x128xf32>
    %241 = arith.addf %239, %240 : vector<16x128xf32>
    %242 = arith.mulf %241, %222 : vector<16x128xf32>
    %cst_56 = arith.constant 1.00167406 : f32
    %243 = vector.broadcast %cst_56 : f32 to vector<16x128xf32>
    %244 = arith.addf %242, %243 : vector<16x128xf32>
    %245 = arith.mulf %244, %222 : vector<16x128xf32>
    %cst_57 = arith.constant 2.83297682 : f32
    %246 = vector.broadcast %cst_57 : f32 to vector<16x128xf32>
    %247 = arith.addf %245, %246 : vector<16x128xf32>
    %cst_58 = arith.constant 5.000000e+00 : f32
    %248 = vector.broadcast %cst_58 : f32 to vector<16x128xf32>
    %249 = arith.cmpf olt, %192, %248 : vector<16x128xf32>
    %250 = arith.select %249, %219, %247 : vector<16x128xi1>, vector<16x128xf32>
    %251 = arith.mulf %250, %184 : vector<16x128xf32>
    %cst_59 = arith.constant 1.41421354 : f32
    %252 = vector.broadcast %cst_59 : f32 to vector<16x128xf32>
    %253 = arith.mulf %252, %251 : vector<16x128xf32>
    %c0_60 = arith.constant 0 : index
    %c0_61 = arith.constant 0 : index
    %254 = vector.load %arg2[%c0_60, %c0_61] : memref<16x128xf32, #tpu.memory_space<vmem>>, vector<16x128xf32>
    %cst_62 = arith.constant 2.500000e-02 : f32
    %255 = vector.broadcast %cst_62 : f32 to vector<16x128xf32>
    %256 = arith.mulf %253, %255 : vector<16x128xf32>
    %cst_63 = arith.constant 0.000000e+00 : f32
    %257 = vector.broadcast %cst_63 : f32 to vector<16x128xf32>
    %258 = arith.addf %256, %257 : vector<16x128xf32>
    %259 = arith.addf %254, %258 : vector<16x128xf32>
    %cst_64 = arith.constant 0.000000e+00 : f32
    %cst_65 = arith.constant 1.000000e+00 : f32
    %260 = vector.broadcast %cst_64 : f32 to vector<16x128xf32>
    %261 = arith.maximumf %260, %259 : vector<16x128xf32>
    %262 = vector.broadcast %cst_65 : f32 to vector<16x128xf32>
    %263 = arith.minimumf %262, %261 : vector<16x128xf32>
    %c0_66 = arith.constant 0 : index
    %c0_67 = arith.constant 0 : index
    %264 = vector.load %arg3[%c0_66, %c0_67] : memref<16x128xf32, #tpu.memory_space<vmem>>, vector<16x128xf32>
    tpu.vector_store %arg3[%c0_66, %c0_67], %263 {strides = array<i32>} : memref<16x128xf32, #tpu.memory_space<vmem>>, vector<16x128xf32>,
    return
  }
  func.func @transform_0(%arg0: i32, %arg1: memref<1xi32, #tpu.memory_space<smem>>) -> (i32, i32) {
    %c0_i32 = arith.constant 0 : i32
    %c0_i32_0 = arith.constant 0 : i32
    return %arg0, %c0_i32 : i32, i32
  }
  func.func @transform_1(%arg0: i32, %arg1: memref<1xi32, #tpu.memory_space<smem>>) -> (i32, i32) {
    %c0_i32 = arith.constant 0 : i32
    %c0_i32_0 = arith.constant 0 : i32
    return %arg0, %c0_i32 : i32, i32
  }
}

</mosaic_0001>

<llo_original>
// kernel: tpu_custom_call.1
$region0: #{tpu_custom_call.1}
  #allocation0 [shape = 'u32[]', space=smem, size = 0x4, offset = 0x4, fixed_abs, tag = 'smem constant byte address 0x4 - core index']
  #allocation1 [shape = 'u32[144,128]{1,0:T(1,128)}', space=vmem, size = 0x12000, scoped, tag = 'internal scratch']
  #allocation2 [shape = 's32[1]{0}', space=sflag, size = 0x4, scoped, tag = 'scoped memory for tpu_custom_call.1']
  #allocation3 [shape = 's32[1]{0:T(128)S(6)}', space=smem, size = 0x200, scoped, tag = 'prefetched SMEM operand 0']
  %s0 = inlined_call_operand.<no memory space> [shape: s32[1], index: 0, kind: input, shape index: {}]
  %s1 = inlined_call_operand.hbm [shape: f32[16,128], index: 1, kind: input, shape index: {}]
  %s2 = inlined_call_operand.hbm [shape: f32[16,128], index: 2, kind: output, shape index: {}]
  %s3 = sld [smem:[#allocation0]]
  $region18: #{tpu_custom_call.1} parent=0
    _
  %s5 = ssub.s32 1, %s3
  %s6 = scalar_select 0, %s5, %s3
  %7 = sst [smem:[#allocation3]] %s0
  $region1: #{tpu_custom_call.1} parent=0
    #allocation4 [shape = 'u8[8192]{0}', space=vmem, size = 0x2000, scoped, tag = 'input window, operand 1, single buffered']
    #allocation5 [shape = 's32[1]{0}', space=sflag, size = 0x4, scoped, tag = 'scoped memory for tpu_custom_call.1']
    #allocation6 [shape = 's32[1]{0}', space=sflag, size = 0x4, scoped, tag = 'scoped memory for tpu_custom_call.1']
    #allocation7 [shape = 'u8[8192]{0}', space=vmem, size = 0x2000, scoped, tag = 'output window, operand 0, single buffered']
    %8 = vsyncpa [#allocation5], 0
    %9 = vsyncpa [#allocation6], 0
    // Predicated region
    $region2: #{tpu_custom_call.1} parent=1 // pred_check
      _
    $region3: #{tpu_custom_call.1} parent=1 // pred_check_branch
      %11 = sbr.rel (0) target = $region5
    $region4: #{tpu_custom_call.1} parent=1 // pred_region
      %s13 = ssub.s32 256, 256
      %14 = vsyncadd [#allocation5], %s13
      %s15 = sshll.u32 [#allocation4], 4
      %s16 = int_to_ptr.vmem [resolvable:$true] %s15
      %21 = dma.hbm_to_vmem [thread:$0]  %s1, 256, %s16, [#allocation5], 128, 128, 8
    $region5: #{tpu_custom_call.1} parent=1 // pred_fallthru
      _
    // Predicated region
    $region6: #{tpu_custom_call.1} parent=1 // pred_check
      _
    $region7: #{tpu_custom_call.1} parent=1 // pred_check_branch
      %23 = sbr.rel (0) target = $region9
    $region8: #{tpu_custom_call.1} parent=1 // pred_region
      %24 = dma.done [#allocation5], 256
    $region9: #{tpu_custom_call.1} parent=1 // pred_fallthru
      _
    %s25 = smul.u32 0, 2048
    %v26 = vlaneseq
    %v27 = vshrl.u32 %v26, 7
    %v28 = vadd.s32 %v27, 8
    %v29 = vlaneseq
    %v30 = vand.u32 %v29, 127
    %v31 = vshll.u32 %v27, 7
    %v32 = vshll.u32 %v28, 7
    %v33 = vstv %s25
    %v34 = vadd.s32 %v33, %v31
    %v35 = vadd.s32 %v33, %v32
    %v36 = vadd.s32 %v34, %v30
    %v37 = vadd.s32 %v35, %v30
    %s38 = sld [smem:[#allocation3]]
    %s39 = sxor.u32 %s38, 2654435769
    %s40 = sxor.u32 %s39, 466688986
    %v41 = vstv %s38
    %v42 = vadd.s32 %v36, %v41
    %v43 = vadd.s32 %v37, %v41
    %v44 = vadd.s32 %v42, 3279777354
    %v45 = vadd.s32 %v43, 3279777354
    %v46 = vxor.u32 %v44, 2915653743
    %v47 = vxor.u32 %v45, 2915653743
    %v48 = vadd.s32 %v44, %v46
    %v49 = vadd.s32 %v45, %v47
    %v50 = vshll.u32 %v46, 15
    %v51 = vshll.u32 %v47, 15
    %v52 = vshrl.u32 %v46, 17
    %v53 = vshrl.u32 %v47, 17
    %v54 = vor.u32 %v50, %v52
    %v55 = vor.u32 %v51, %v53
    %v56 = vxor.u32 %v54, %v48
    %v57 = vxor.u32 %v55, %v49
    %v58 = vadd.s32 %v48, %v56
    %v59 = vadd.s32 %v49, %v57
    %v60 = vshll.u32 %v56, 26
    %v61 = vshll.u32 %v57, 26
    %v62 = vshrl.u32 %v56, 6
    %v63 = vshrl.u32 %v57, 6
    %v64 = vor.u32 %v60, %v62
    %v65 = vor.u32 %v61, %v63
    %v66 = vxor.u32 %v64, %v58
    %v67 = vxor.u32 %v65, %v59
    %v68 = vadd.s32 %v58, %v66
    %v69 = vadd.s32 %v59, %v67
    %v70 = vshll.u32 %v66, 6
    %v71 = vshll.u32 %v67, 6
    %v72 = vshrl.u32 %v66, 26
    %v73 = vshrl.u32 %v67, 26
    %v74 = vor.u32 %v70, %v72
    %v75 = vor.u32 %v71, %v73
    %v76 = vxor.u32 %v74, %v68
    %v77 = vxor.u32 %v75, %v69
    %v78 = vadd.s32 %v68, 2654435769
    %v79 = vadd.s32 %v69, 2654435769
    %v80 = vstv %s40
    %v81 = vadd.s32 %v76, %v80
    %v82 = vadd.s32 %v77, %v80
    %v83 = vadd.s32 %v81, 1
    %v84 = vadd.s32 %v82, 1
    %v85 = vadd.s32 %v78, %v83
    %v86 = vadd.s32 %v79, %v84
    %v87 = vshll.u32 %v83, 17
    %v88 = vshll.u32 %v84, 17
    %v89 = vshrl.u32 %v83, 15
    %v90 = vshrl.u32 %v84, 15
    %v91 = vor.u32 %v87, %v89
    %v92 = vor.u32 %v88, %v90
    %v93 = vxor.u32 %v91, %v85
    %v94 = vxor.u32 %v92, %v86
    %v95 = vadd.s32 %v85, %v93
    %v96 = vadd.s32 %v86, %v94
    %v97 = vshll.u32 %v93, 29
    %v98 = vshll.u32 %v94, 29
    %v99 = vshrl.u32 %v93, 3
    %v100 = vshrl.u32 %v94, 3
    %v101 = vor.u32 %v97, %v99
    %v102 = vor.u32 %v98, %v100
    %v103 = vxor.u32 %v101, %v95
    %v104 = vxor.u32 %v102, %v96
    %v105 = vadd.s32 %v95, %v103
    %v106 = vadd.s32 %v96, %v104
    %v107 = vshll.u32 %v103, 16
    %v108 = vshll.u32 %v104, 16
    %v109 = vshrl.u32 %v103, 16
    %v110 = vshrl.u32 %v104, 16
    %v111 = vor.u32 %v107, %v109
    %v112 = vor.u32 %v108, %v110
    %v113 = vxor.u32 %v111, %v105
    %v114 = vxor.u32 %v112, %v106
    %v115 = vadd.s32 %v105, %v113
    %v116 = vadd.s32 %v106, %v114
    %v117 = vshll.u32 %v113, 24
    %v118 = vshll.u32 %v114, 24
    %v119 = vshrl.u32 %v113, 8
    %v120 = vshrl.u32 %v114, 8
    %v121 = vor.u32 %v117, %v119
    %v122 = vor.u32 %v118, %v120
    %v123 = vxor.u32 %v121, %v115
    %v124 = vxor.u32 %v122, %v116
    %v125 = vadd.s32 %v115, %v80
    %v126 = vadd.s32 %v116, %v80
    %v127 = vadd.s32 %v123, %v41
    %v128 = vadd.s32 %v124, %v41
    %v129 = vadd.s32 %v127, 2
    %v130 = vadd.s32 %v128, 2
    %v131 = vadd.s32 %v125, %v129
    %v132 = vadd.s32 %v126, %v130
    %v133 = vshll.u32 %v129, 13
    %v134 = vshll.u32 %v130, 13
    %v135 = vshrl.u32 %v129, 19
    %v136 = vshrl.u32 %v130, 19
    %v137 = vor.u32 %v133, %v135
    %v138 = vor.u32 %v134, %v136
    %v139 = vxor.u32 %v137, %v131
    %v140 = vxor.u32 %v138, %v132
    %v141 = vadd.s32 %v131, %v139
    %v142 = vadd.s32 %v132, %v140
    %v143 = vshll.u32 %v139, 15
    %v144 = vshll.u32 %v140, 15
    %v145 = vshrl.u32 %v139, 17
    %v146 = vshrl.u32 %v140, 17
    %v147 = vor.u32 %v143, %v145
    %v148 = vor.u32 %v144, %v146
    %v149 = vxor.u32 %v147, %v141
    %v150 = vxor.u32 %v148, %v142
    %v151 = vadd.s32 %v141, %v149
    %v152 = vadd.s32 %v142, %v150
    %v153 = vshll.u32 %v149, 26
    %v154 = vshll.u32 %v150, 26
    %v155 = vshrl.u32 %v149, 6
    %v156 = vshrl.u32 %v150, 6
    %v157 = vor.u32 %v153, %v155
    %v158 = vor.u32 %v154, %v156
    %v159 = vxor.u32 %v157, %v151
    %v160 = vxor.u32 %v158, %v152
    %v161 = vadd.s32 %v151, %v159
    %v162 = vadd.s32 %v152, %v160
    %v163 = vshll.u32 %v159, 6
    %v164 = vshll.u32 %v160, 6
    %v165 = vshrl.u32 %v159, 26
    %v166 = vshrl.u32 %v160, 26
    %v167 = vor.u32 %v163, %v165
    %v168 = vor.u32 %v164, %v166
    %v169 = vxor.u32 %v167, %v161
    %v170 = vxor.u32 %v168, %v162
    %v171 = vadd.s32 %v161, %v41
    %v172 = vadd.s32 %v162, %v41
    %v173 = vadd.s32 %v169, 2654435769
    %v174 = vadd.s32 %v170, 2654435769
    %v175 = vadd.s32 %v173, 3
    %v176 = vadd.s32 %v174, 3
    %v177 = vadd.s32 %v171, %v175
    %v178 = vadd.s32 %v172, %v176
    %v179 = vshll.u32 %v175, 17
    %v180 = vshll.u32 %v176, 17
    %v181 = vshrl.u32 %v175, 15
    %v182 = vshrl.u32 %v176, 15
    %v183 = vor.u32 %v179, %v181
    %v184 = vor.u32 %v180, %v182
    %v185 = vxor.u32 %v183, %v177
    %v186 = vxor.u32 %v184, %v178
    %v187 = vadd.s32 %v177, %v185
    %v188 = vadd.s32 %v178, %v186
    %v189 = vshll.u32 %v185, 29
    %v190 = vshll.u32 %v186, 29
    %v191 = vshrl.u32 %v185, 3
    %v192 = vshrl.u32 %v186, 3
    %v193 = vor.u32 %v189, %v191
    %v194 = vor.u32 %v190, %v192
    %v195 = vxor.u32 %v193, %v187
    %v196 = vxor.u32 %v194, %v188
    %v197 = vadd.s32 %v187, %v195
    %v198 = vadd.s32 %v188, %v196
    %v199 = vshll.u32 %v195, 16
    %v200 = vshll.u32 %v196, 16
    %v201 = vshrl.u32 %v195, 16
    %v202 = vshrl.u32 %v196, 16
    %v203 = vor.u32 %v199, %v201
    %v204 = vor.u32 %v200, %v202
    %v205 = vxor.u32 %v203, %v197
    %v206 = vxor.u32 %v204, %v198
    %v207 = vadd.s32 %v197, %v205
    %v208 = vadd.s32 %v198, %v206
    %v209 = vshll.u32 %v205, 24
    %v210 = vshll.u32 %v206, 24
    %v211 = vshrl.u32 %v205, 8
    %v212 = vshrl.u32 %v206, 8
    %v213 = vor.u32 %v209, %v211
    %v214 = vor.u32 %v210, %v212
    %v215 = vxor.u32 %v213, %v207
    %v216 = vxor.u32 %v214, %v208
    %v217 = vadd.s32 %v207, 2654435769
    %v218 = vadd.s32 %v208, 2654435769
    %v219 = vadd.s32 %v215, %v80
    %v220 = vadd.s32 %v216, %v80
    %v221 = vadd.s32 %v219, 4
    %v222 = vadd.s32 %v220, 4
    %v223 = vadd.s32 %v217, %v221
    %v224 = vadd.s32 %v218, %v222
    %v225 = vshll.u32 %v221, 13
    %v226 = vshll.u32 %v222, 13
    %v227 = vshrl.u32 %v221, 19
    %v228 = vshrl.u32 %v222, 19
    %v229 = vor.u32 %v225, %v227
    %v230 = vor.u32 %v226, %v228
    %v231 = vxor.u32 %v229, %v223
    %v232 = vxor.u32 %v230, %v224
    %v233 = vadd.s32 %v223, %v231
    %v234 = vadd.s32 %v224, %v232
    %v235 = vshll.u32 %v231, 15
    %v236 = vshll.u32 %v232, 15
    %v237 = vshrl.u32 %v231, 17
    %v238 = vshrl.u32 %v232, 17
    %v239 = vor.u32 %v235, %v237
    %v240 = vor.u32 %v236, %v238
    %v241 = vxor.u32 %v239, %v233
    %v242 = vxor.u32 %v240, %v234
    %v243 = vadd.s32 %v233, %v241
    %v244 = vadd.s32 %v234, %v242
    %v245 = vshll.u32 %v241, 26
    %v246 = vshll.u32 %v242, 26
    %v247 = vshrl.u32 %v241, 6
    %v248 = vshrl.u32 %v242, 6
    %v249 = vor.u32 %v245, %v247
    %v250 = vor.u32 %v246, %v248
    %v251 = vxor.u32 %v249, %v243
    %v252 = vxor.u32 %v250, %v244
    %v253 = vadd.s32 %v243, %v251
    %v254 = vadd.s32 %v244, %v252
    %v255 = vadd.s32 %v253, %v80
    %v256 = vadd.s32 %v254, %v80
    %v257 = vshrl.u32 %v255, 9
    %v258 = vshrl.u32 %v256, 9
    %v259 = vcvt.s32.f32 %v257
    %v260 = vcvt.s32.f32 %v258
    %v261 = vadd.f32 %v259, 0.5
    %v262 = vadd.f32 %v260, 0.5
    %v263 = vmul.f32 %v261, 1.1920929e-07
    %v264 = vmul.f32 %v262, 1.1920929e-07
    %v265 = vmul.f32 %v263, 2.0
    %v266 = vmul.f32 %v264, 2.0
    %v267 = vsub.f32 %v265, 1.0
    %v268 = vsub.f32 %v266, 1.0
    %v269 = vmul.f32 %v263, 4.0
    %v270 = vmul.f32 %v264, 4.0
    %v271 = vsub.f32 1.0, %v263
    %v272 = vsub.f32 1.0, %v264
    %v273 = vmul.f32 %v269, %v271
    %v274 = vmul.f32 %v270, %v272
    %v275 = vlog2.pop %v273
    %v276 = vmul.f32 %v275, 0.6931472
    %v277 = vlog2.pop %v274
    %v278 = vmul.f32 %v277, 0.6931472
    %v279 = vsub.f32 0.0, %v276
    %v280 = vsub.f32 0.0, %v278
    %v281 = vsub.f32 %v279, 2.5
    %v282 = vsub.f32 %v280, 2.5
    %v283 = vmul.f32 %v281, 2.8102264e-08
    %v284 = vmul.f32 %v282, 2.8102264e-08
    %v285 = vadd.f32 %v283, 3.4327394e-07
    %v286 = vadd.f32 %v284, 3.4327394e-07
    %v287 = vmul.f32 %v285, %v281
    %v288 = vmul.f32 %v286, %v282
    %v289 = vadd.f32 %v287, -3.5233877e-06
    %v290 = vadd.f32 %v288, -3.5233877e-06
    %v291 = vmul.f32 %v289, %v281
    %v292 = vmul.f32 %v290, %v282
    %v293 = vadd.f32 %v291, -4.3915065e-06
    %v294 = vadd.f32 %v292, -4.3915065e-06
    %v295 = vmul.f32 %v293, %v281
    %v296 = vmul.f32 %v294, %v282
    %v297 = vadd.f32 %v295, 0.00021858087
    %v298 = vadd.f32 %v296, 0.00021858087
    %v299 = vmul.f32 %v297, %v281
    %v300 = vmul.f32 %v298, %v282
    %v301 = vadd.f32 %v299, -0.001253725
    %v302 = vadd.f32 %v300, -0.001253725
    %v303 = vmul.f32 %v301, %v281
    %v304 = vmul.f32 %v302, %v282
    %v305 = vadd.f32 %v303, -0.0041776816
    %v306 = vadd.f32 %v304, -0.0041776816
    %v307 = vmul.f32 %v305, %v281
    %v308 = vmul.f32 %v306, %v282
    %v309 = vadd.f32 %v307, 0.24664073
    %v310 = vadd.f32 %v308, 0.24664073
    %v311 = vmul.f32 %v309, %v281
    %v312 = vmul.f32 %v310, %v282
    %v313 = vadd.f32 %v311, 1.5014094
    %v314 = vadd.f32 %v312, 1.5014094
    %v315 = vrsqrt.pop %v279
    %v316 = vmul.f32 %v279, %v315
    %vm317 = vcmp.eq.f32.partialorder %v279, inf
    %v318 = vsel %vm317, %v279, %v316
    %vm319 = vcmp.eq.f32.partialorder %v279, 0.0
    %v320 = vand.u32 %v279, 2147483648
    %v321 = vsel %vm319, %v320, %v318
    %v322 = vrsqrt.pop %v280
    %v323 = vmul.f32 %v280, %v322
    %vm324 = vcmp.eq.f32.partialorder %v280, inf
    %v325 = vsel %vm324, %v280, %v323
    %vm326 = vcmp.eq.f32.partialorder %v280, 0.0
    %v327 = vand.u32 %v280, 2147483648
    %v328 = vsel %vm326, %v327, %v325
    %v329 = vsub.f32 %v321, 3.0
    %v330 = vsub.f32 %v328, 3.0
    %v331 = vmul.f32 %v329, -0.00020021426
    %v332 = vmul.f32 %v330, -0.00020021426
    %v333 = vadd.f32 %v331, 0.00010095056
    %v334 = vadd.f32 %v332, 0.00010095056
    %v335 = vmul.f32 %v333, %v329
    %v336 = vmul.f32 %v334, %v330
    %v337 = vadd.f32 %v335, 0.0013493432
    %v338 = vadd.f32 %v336, 0.0013493432
    %v339 = vmul.f32 %v337, %v329
    %v340 = vmul.f32 %v338, %v330
    %v341 = vadd.f32 %v339, -0.0036734284
    %v342 = vadd.f32 %v340, -0.0036734284
    %v343 = vmul.f32 %v341, %v329
    %v344 = vmul.f32 %v342, %v330
    %v345 = vadd.f32 %v343, 0.0057395077
    %v346 = vadd.f32 %v344, 0.0057395077
    %v347 = vmul.f32 %v345, %v329
    %v348 = vmul.f32 %v346, %v330
    %v349 = vadd.f32 %v347, -0.0076224613
    %v350 = vadd.f32 %v348, -0.0076224613
    %v351 = vmul.f32 %v349, %v329
    %v352 = vmul.f32 %v350, %v330
    %v353 = vadd.f32 %v351, 0.0094388705
    %v354 = vadd.f32 %v352, 0.0094388705
    %v355 = vmul.f32 %v353, %v329
    %v356 = vmul.f32 %v354, %v330
    %v357 = vadd.f32 %v355, 1.001674
    %v358 = vadd.f32 %v356, 1.001674
    %v359 = vmul.f32 %v357, %v329
    %v360 = vmul.f32 %v358, %v330
    %v361 = vadd.f32 %v359, 2.8329768
    %v362 = vadd.f32 %v360, 2.8329768
    %vm363 = vcmp.lt.f32.partialorder %v279, 5.0
    %vm364 = vcmp.lt.f32.partialorder %v280, 5.0
    %v365 = vsel %vm363, %v313, %v361
    %v366 = vsel %vm364, %v314, %v362
    %v367 = vmul.f32 %v365, %v267
    %v368 = vmul.f32 %v366, %v268
    %v369 = vmul.f32 %v367, 1.4142135
    %v370 = vmul.f32 %v368, 1.4142135
    %v371 = vld [vmem:[#allocation4] sm:$0xff]
    %v372 = vld [vmem:[#allocation4 + $0x8] sm:$0xff]
    %v373 = vmul.f32 %v369, 0.025
    %v374 = vmul.f32 %v370, 0.025
    %v375 = vadd.f32 %v373, 0.0
    %v376 = vadd.f32 %v374, 0.0
    %v377 = vadd.f32 %v371, %v375
    %v378 = vadd.f32 %v372, %v376
    %v379 = vmax.f32 %v377, 0.0
    %v380 = vmax.f32 %v378, 0.0
    %v381 = vmin.f32 %v379, 1.0
    %v382 = vmin.f32 %v380, 1.0
    %383 = vst [vmem:[#allocation7] sm:$0xff] %v381
    %384 = vst [vmem:[#allocation7 + $0x8] sm:$0xff] %v382
    // Predicated region
    $region10: #{tpu_custom_call.1} parent=1 // pred_check
      _
    $region11: #{tpu_custom_call.1} parent=1 // pred_check_branch
      %386 = sbr.rel (0) target = $region13
    $region12: #{tpu_custom_call.1} parent=1 // pred_region
      %s388 = ssub.s32 256, 256
      %389 = vsyncadd [#allocation6], %s388
      %s390 = sshll.u32 [#allocation7], 4
      %s391 = int_to_ptr.vmem [resolvable:$true] %s390
      %396 = dma.vmem_to_hbm [thread:$0]  %s391, 256, %s2, [#allocation6], 128, 128, 8
    $region13: #{tpu_custom_call.1} parent=1 // pred_fallthru
      _
    // Predicated region
    $region14: #{tpu_custom_call.1} parent=1 // pred_check
      _
    $region15: #{tpu_custom_call.1} parent=1 // pred_check_branch
      %398 = sbr.rel (0) target = $region17
    $region16: #{tpu_custom_call.1} parent=1 // pred_region
      %399 = dma.done [#allocation6], 256
    $region17: #{tpu_custom_call.1} parent=1 // pred_fallthru
      _
    %400 = vsyncpa [#allocation5], 1
    %401 = vsyncpa [#allocation6], 1

</llo_original>
